<compile_context>
chip_gen: v5e
topology: v5e:2x2
jax: 0.10.0
libtpu: 0.0.40
codegen_flags: <defaults>
</compile_context>

<pallas_src>
import jax
import jax.numpy as jnp
from jax.experimental import pallas as pl
from jax.experimental.pallas import tpu as pltpu

_LANE = 128
_SUBLANE = 8


# ----------------------------------------------------------------------------
# Fused kernel: mean over dim=1 + Linear, one batch tile per grid step.
# ----------------------------------------------------------------------------
def _mean_fc_kernel(x_ref, w_ref, b_ref, out_ref):
    # x_ref : (bn, S, D)     activation tile (D on lanes, S on sublanes)
    # w_ref : (D, C_pad)     fc weight, transposed and pre-scaled by 1/S
    # b_ref : (1, C_pad)     fc bias (zero padded to lane width)
    # out_ref: (bn, C_pad)   lane-dense logits tile
    feats = jnp.sum(x_ref[...], axis=1)          # (bn, D) sublane (XLU) reduction
    # Dropout(p=0) is the identity at inference — nothing to emit.
    # TODO(synk): training-mode dropout (p>0) is not emitted here.
    logits = jnp.dot(feats, w_ref[...], preferred_element_type=jnp.float32)
    out_ref[...] = (logits + b_ref[...]).astype(out_ref.dtype)


def _round_up(x, m):
    return ((x + m - 1) // m) * m


# ----------------------------------------------------------------------------
# Wrapper
# ----------------------------------------------------------------------------
def mean_model_pallas(x, fc_w, fc_b, *, batch_block=None):
    """x: (N, S, D) float32; fc_w: (C, D) torch-style Linear weight; fc_b: (C,)."""
    n, s, d = x.shape
    c = fc_w.shape[0]

    # --- batch tiling --------------------------------------------------------
    if batch_block is None:
        # Target ~8 MiB activation tiles: streams x at near-roofline, and
        # double-buffering (2x) stays well inside the 32 MiB default scoped
        # VMEM limit and v7x's 64 MiB physical VMEM.
        target = max(_SUBLANE, (8 * 1024 * 1024) // max(1, s * d * 4))
        bn = min(512, target)
        if n > _SUBLANE:
            # Prefer >= 2 grid steps so the v7x megacore can split the batch.
            bn = min(bn, _round_up(pl.cdiv(n, 2), _SUBLANE))
    else:
        bn = batch_block
    bn = min(bn, _round_up(n, _SUBLANE))          # don't over-pad tiny batches
    bn = max(_SUBLANE, _round_up(bn, _SUBLANE))   # sublane-aligned output tile

    n_pad = _round_up(n, bn)
    if n_pad != n:
        x = jnp.pad(x, ((0, n_pad - n), (0, 0), (0, 0)))

    # --- lane-dense, pre-scaled weights/bias ---------------------------------
    c_pad = max(_LANE, _round_up(c, _LANE))
    w_t = jnp.zeros((d, c_pad), jnp.float32).at[:, :c].set(
        jnp.transpose(fc_w).astype(jnp.float32) * (1.0 / s))   # fold 1/S into W
    b_p = jnp.zeros((1, c_pad), jnp.float32).at[:, :c].set(
        fc_b.astype(jnp.float32))

    out = pl.pallas_call(
        _mean_fc_kernel,
        grid=(n_pad // bn,),
        in_specs=[
            pl.BlockSpec((bn, s, d), lambda i: (i, 0, 0)),    # streamed x tiles
            pl.BlockSpec((d, c_pad), lambda i: (0, 0)),       # weights (resident)
            pl.BlockSpec((1, c_pad), lambda i: (0, 0)),       # bias    (resident)
        ],
        out_specs=pl.BlockSpec((bn, c_pad), lambda i: (i, 0)),
        out_shape=jax.ShapeDtypeStruct((n_pad, c_pad), jnp.float32),
        compiler_params=pltpu.CompilerParams(
            dimension_semantics=("parallel",)),
    )(x, w_t, b_p)

    return out[:n, :c]


# ----------------------------------------------------------------------------
# Pure-JAX reference (mirrors the PyTorch forward at inference)
# ----------------------------------------------------------------------------
def mean_model_ref(x, fc_w, fc_b):
    feats = jnp.mean(x, axis=1)                   # (N, D)
    return feats @ fc_w.T + fc_b[None, :]         # (N, C)


if __name__ == "__main__":
    input_size = 512       # MeanModel default
    output_classes = 2     # MeanModel default
    batch, seq = 2, 8

    key = jax.random.PRNGKey(0)
    kx, kw, kb = jax.random.split(key, 3)
    x = jax.random.normal(kx, (batch, seq, input_size), jnp.float32)
    fc_w = 0.05 * jax.random.normal(kw, (output_classes, input_size), jnp.float32)
    fc_b = 0.05 * jax.random.normal(kb, (output_classes,), jnp.float32)

    out = jax.block_until_ready(mean_model_pallas(x, fc_w, fc_b))

    ref = mean_model_ref(x, fc_w, fc_b)
    assert out.shape == ref.shape == (batch, output_classes)
    max_err = float(jnp.max(jnp.abs(out - ref)))
    assert jnp.allclose(out, ref, rtol=1e-3, atol=1e-3), f"max abs err = {max_err}"
    print("KERNEL_OK")
</pallas_src>

<mosaic_0001>
module attributes {stable_mosaic.version = 11 : i64} {
  func.func @_mean_fc_kernel(%arg0: i32, %arg1: memref<8x8x512xf32, #tpu.memory_space<vmem>>, %arg2: memref<512x128xf32, #tpu.memory_space<vmem>>, %arg3: memref<1x128xf32, #tpu.memory_space<vmem>>, %arg4: memref<8x128xf32, #tpu.memory_space<vmem>>) attributes {dimension_semantics = [#tpu.dimension_semantics<parallel>], iteration_bounds = array<i64: 1>, scalar_prefetch = 0 : i64, scratch_operands = 0 : i64, tpu.core_type = #tpu.core_type<tc>, window_params = [{transform_indices = @transform_0, window_bounds = array<i64: 8, 8, 512>}, {pipeline_mode = #tpu.pipeline_mode<synchronous>, transform_indices = @transform_1, window_bounds = array<i64: 512, 128>}, {pipeline_mode = #tpu.pipeline_mode<synchronous>, transform_indices = @transform_2, window_bounds = array<i64: 1, 128>}, {transform_indices = @transform_3, window_bounds = array<i64: 8, 128>}]} {
    %c0 = arith.constant 0 : index
    %c0_0 = arith.constant 0 : index
    %c0_1 = arith.constant 0 : index
    %0 = vector.load %arg1[%c0, %c0_0, %c0_1] : memref<8x8x512xf32, #tpu.memory_space<vmem>>, vector<8x8x512xf32>
    %cst = arith.constant dense<0.000000e+00> : vector<8x512xf32>
    %1 = vector.multi_reduction <add>, %0, %cst [1] : vector<8x8x512xf32> to vector<8x512xf32>
    %c0_2 = arith.constant 0 : index
    %c0_3 = arith.constant 0 : index
    %2 = vector.load %arg2[%c0_2, %c0_3] : memref<512x128xf32, #tpu.memory_space<vmem>>, vector<512x128xf32>
    %cst_4 = arith.constant dense<0.000000e+00> : vector<8x128xf32>
    %3 = tpu.matmul %1, %2, %cst_4 {dimension_numbers = #tpu.dot_dimension_numbers<[1], [0], [0], [1], [0, 0, 1, 1], [], []>} : vector<8x512xf32>, vector<512x128xf32>, vector<8x128xf32> -> vector<8x128xf32>
    %c0_5 = arith.constant 0 : index
    %c0_6 = arith.constant 0 : index
    %4 = vector.load %arg3[%c0_5, %c0_6] : memref<1x128xf32, #tpu.memory_space<vmem>>, vector<1x128xf32>
    %5 = vector.broadcast %4 : vector<1x128xf32> to vector<8x128xf32>
    %6 = arith.addf %3, %5 : vector<8x128xf32>
    %c0_7 = arith.constant 0 : index
    %c0_8 = arith.constant 0 : index
    %7 = vector.load %arg4[%c0_7, %c0_8] : memref<8x128xf32, #tpu.memory_space<vmem>>, vector<8x128xf32>
    tpu.vector_store %arg4[%c0_7, %c0_8], %6 {strides = array<i32>} : memref<8x128xf32, #tpu.memory_space<vmem>>, vector<8x128xf32>,
    return
  }
  func.func @transform_0(%arg0: i32) -> (i32, i32, i32) {
    %c0_i32 = arith.constant 0 : i32
    %c0_i32_0 = arith.constant 0 : i32
    %c0_i32_1 = arith.constant 0 : i32
    return %arg0, %c0_i32, %c0_i32_0 : i32, i32, i32
  }
  func.func @transform_1(%arg0: i32) -> (i32, i32) {
    %c0_i32 = arith.constant 0 : i32
    %c0_i32_0 = arith.constant 0 : i32
    %c0_i32_1 = arith.constant 0 : i32
    return %c0_i32, %c0_i32_0 : i32, i32
  }
  func.func @transform_2(%arg0: i32) -> (i32, i32) {
    %c0_i32 = arith.constant 0 : i32
    %c0_i32_0 = arith.constant 0 : i32
    %c0_i32_1 = arith.constant 0 : i32
    return %c0_i32, %c0_i32_0 : i32, i32
  }
  func.func @transform_3(%arg0: i32) -> (i32, i32) {
    %c0_i32 = arith.constant 0 : i32
    %c0_i32_0 = arith.constant 0 : i32
    return %arg0, %c0_i32 : i32, i32
  }
}

</mosaic_0001>

<llo_original>
// kernel: tpu_custom_call.1
$region0: #{tpu_custom_call.1}
  #allocation0 [shape = 'u32[]', space=smem, size = 0x4, offset = 0x4, fixed_abs, tag = 'smem constant byte address 0x4 - core index']
  #allocation1 [shape = 'u32[72,128]{1,0:T(1,128)}', space=vmem, size = 0x9000, scoped, tag = 'internal scratch']
  %s0 = inlined_call_operand.hbm [shape: f32[8,8,512], index: 0, kind: input, shape index: {}]
  %s1 = inlined_call_operand.hbm [shape: f32[512,128], index: 1, kind: input, shape index: {}]
  %s2 = inlined_call_operand.vmem [shape: f32[1,128], index: 2, kind: input, shape index: {}]
  %s3 = inlined_call_operand.hbm [shape: f32[8,128], index: 3, kind: output, shape index: {}]
  %s4 = sld [smem:[#allocation0]]
  $region30: #{tpu_custom_call.1} parent=0
    _
  %s6 = ssub.s32 1, %s4
  %s7 = scalar_select 0, %s6, %s4
  $region1: #{tpu_custom_call.1} parent=0
    #allocation2 [shape = 'u8[131072]{0}', space=vmem, size = 0x20000, scoped, tag = 'input window, operand 0, single buffered']
    #allocation3 [shape = 's32[1]{0}', space=sflag, size = 0x4, scoped, tag = 'scoped memory for tpu_custom_call.1']
    #allocation4 [shape = 's32[1]{0}', space=sflag, size = 0x4, scoped, tag = 'scoped memory for tpu_custom_call.1']
    #allocation5 [shape = 'u8[262144]{0}', space=vmem, size = 0x40000, scoped, tag = 'input window, operand 1, single buffered']
    #allocation6 [shape = 's32[1]{0}', space=sflag, size = 0x4, scoped, tag = 'scoped memory for tpu_custom_call.1']
    #allocation7 [shape = 'u8[4096]{0}', space=vmem, size = 0x1000, scoped, tag = 'output window, operand 0, single buffered']
    %8 = vsyncpa [#allocation3], 0
    %9 = vsyncpa [#allocation6], 0
    %10 = vsyncpa [#allocation4], 0
    // Predicated region
    $region2: #{tpu_custom_call.1} parent=1 // pred_check
      _
    $region3: #{tpu_custom_call.1} parent=1 // pred_check_branch
      %12 = sbr.rel (0) target = $region5
    $region4: #{tpu_custom_call.1} parent=1 // pred_region
      %14 = vsyncadd [#allocation3], 0
      %s15 = sshll.u32 %s0, 4
      %s16 = int_to_ptr.hbm [resolvable:$true] %s15
      %s17 = sshll.u32 [#allocation2], 4
      %s18 = int_to_ptr.vmem [resolvable:$true] %s17
      %23 = dma.hbm_to_vmem [thread:$0]  %s16, 4096, %s18, [#allocation3], 512, 512, 32
    $region5: #{tpu_custom_call.1} parent=1 // pred_fallthru
      _
    // Predicated region
    $region6: #{tpu_custom_call.1} parent=1 // pred_check
      _
    $region7: #{tpu_custom_call.1} parent=1 // pred_check_branch
      %25 = sbr.rel (0) target = $region9
    $region8: #{tpu_custom_call.1} parent=1 // pred_region
      %27 = vsyncadd [#allocation6], 0
      %s28 = sshll.u32 %s1, 4
      %s29 = int_to_ptr.hbm [resolvable:$true] %s28
      %s30 = sshll.u32 [#allocation5], 4
      %s31 = int_to_ptr.vmem [resolvable:$true] %s30
      %36 = dma.hbm_to_vmem [thread:$0]  %s29, 8192, %s31, [#allocation6], 128, 128, 8
    $region9: #{tpu_custom_call.1} parent=1 // pred_fallthru
      _
    // Predicated region
    $region10: #{tpu_custom_call.1} parent=1 // pred_check
      _
    $region11: #{tpu_custom_call.1} parent=1 // pred_check_branch
      %38 = sbr.rel (0) target = $region13
    $region12: #{tpu_custom_call.1} parent=1 // pred_region
      _
    $region13: #{tpu_custom_call.1} parent=1 // pred_fallthru
      _
    // Predicated region
    $region14: #{tpu_custom_call.1} parent=1 // pred_check
      _
    $region15: #{tpu_custom_call.1} parent=1 // pred_check_branch
      %40 = sbr.rel (0) target = $region17
    $region16: #{tpu_custom_call.1} parent=1 // pred_region
      %42 = dma.done [#allocation3], 4096
    $region17: #{tpu_custom_call.1} parent=1 // pred_fallthru
      _
    // Predicated region
    $region18: #{tpu_custom_call.1} parent=1 // pred_check
      _
    $region19: #{tpu_custom_call.1} parent=1 // pred_check_branch
      %44 = sbr.rel (0) target = $region21
    $region20: #{tpu_custom_call.1} parent=1 // pred_region
      %46 = dma.done [#allocation6], 8192
    $region21: #{tpu_custom_call.1} parent=1 // pred_fallthru
      _
    %v47 = vld [vmem:[#allocation2] sm:$0xff]
    %v48 = vld [vmem:[#allocation2 + $0x8] sm:$0xff]
    %v49 = vld [vmem:[#allocation2 + $0x10] sm:$0xff]
    %v50 = vld [vmem:[#allocation2 + $0x18] sm:$0xff]
    %v51 = vld [vmem:[#allocation2 + $0x20] sm:$0xff]
    %v52 = vld [vmem:[#allocation2 + $0x28] sm:$0xff]
    %v53 = vld [vmem:[#allocation2 + $0x30] sm:$0xff]
    %v54 = vld [vmem:[#allocation2 + $0x38] sm:$0xff]
    %v55 = vld [vmem:[#allocation2 + $0x40] sm:$0xff]
    %v56 = vld [vmem:[#allocation2 + $0x48] sm:$0xff]
    %v57 = vld [vmem:[#allocation2 + $0x50] sm:$0xff]
    %v58 = vld [vmem:[#allocation2 + $0x58] sm:$0xff]
    %v59 = vld [vmem:[#allocation2 + $0x60] sm:$0xff]
    %v60 = vld [vmem:[#allocation2 + $0x68] sm:$0xff]
    %v61 = vld [vmem:[#allocation2 + $0x70] sm:$0xff]
    %v62 = vld [vmem:[#allocation2 + $0x78] sm:$0xff]
    %v63 = vld [vmem:[#allocation2 + $0x80] sm:$0xff]
    %v64 = vld [vmem:[#allocation2 + $0x88] sm:$0xff]
    %v65 = vld [vmem:[#allocation2 + $0x90] sm:$0xff]
    %v66 = vld [vmem:[#allocation2 + $0x98] sm:$0xff]
    %v67 = vld [vmem:[#allocation2 + $0xa0] sm:$0xff]
    %v68 = vld [vmem:[#allocation2 + $0xa8] sm:$0xff]
    %v69 = vld [vmem:[#allocation2 + $0xb0] sm:$0xff]
    %v70 = vld [vmem:[#allocation2 + $0xb8] sm:$0xff]
    %v71 = vld [vmem:[#allocation2 + $0xc0] sm:$0xff]
    %v72 = vld [vmem:[#allocation2 + $0xc8] sm:$0xff]
    %v73 = vld [vmem:[#allocation2 + $0xd0] sm:$0xff]
    %v74 = vld [vmem:[#allocation2 + $0xd8] sm:$0xff]
    %v75 = vld [vmem:[#allocation2 + $0xe0] sm:$0xff]
    %v76 = vld [vmem:[#allocation2 + $0xe8] sm:$0xff]
    %v77 = vld [vmem:[#allocation2 + $0xf0] sm:$0xff]
    %v78 = vld [vmem:[#allocation2 + $0xf8] sm:$0xff]
    %v79 = vrot.slane %v47, 4
    %v80 = vadd.f32 %v47, %v79
    %v81 = vrot.slane %v80, 2
    %v82 = vadd.f32 %v80, %v81
    %v83 = vrot.slane %v82, 1
    %v84 = vadd.f32 %v82, %v83
    %v85 = vrot.slane %v48, 4
    %v86 = vadd.f32 %v48, %v85
    %v87 = vrot.slane %v86, 2
    %v88 = vadd.f32 %v86, %v87
    %v89 = vrot.slane %v88, 1
    %v90 = vadd.f32 %v88, %v89
    %v91 = vrot.slane %v49, 4
    %v92 = vadd.f32 %v49, %v91
    %v93 = vrot.slane %v92, 2
    %v94 = vadd.f32 %v92, %v93
    %v95 = vrot.slane %v94, 1
    %v96 = vadd.f32 %v94, %v95
    %v97 = vrot.slane %v50, 4
    %v98 = vadd.f32 %v50, %v97
    %v99 = vrot.slane %v98, 2
    %v100 = vadd.f32 %v98, %v99
    %v101 = vrot.slane %v100, 1
    %v102 = vadd.f32 %v100, %v101
    %v103 = vrot.slane %v51, 4
    %v104 = vadd.f32 %v51, %v103
    %v105 = vrot.slane %v104, 2
    %v106 = vadd.f32 %v104, %v105
    %v107 = vrot.slane %v106, 1
    %v108 = vadd.f32 %v106, %v107
    %v109 = vrot.slane %v52, 4
    %v110 = vadd.f32 %v52, %v109
    %v111 = vrot.slane %v110, 2
    %v112 = vadd.f32 %v110, %v111
    %v113 = vrot.slane %v112, 1
    %v114 = vadd.f32 %v112, %v113
    %v115 = vrot.slane %v53, 4
    %v116 = vadd.f32 %v53, %v115
    %v117 = vrot.slane %v116, 2
    %v118 = vadd.f32 %v116, %v117
    %v119 = vrot.slane %v118, 1
    %v120 = vadd.f32 %v118, %v119
    %v121 = vrot.slane %v54, 4
    %v122 = vadd.f32 %v54, %v121
    %v123 = vrot.slane %v122, 2
    %v124 = vadd.f32 %v122, %v123
    %v125 = vrot.slane %v124, 1
    %v126 = vadd.f32 %v124, %v125
    %v127 = vrot.slane %v55, 4
    %v128 = vadd.f32 %v55, %v127
    %v129 = vrot.slane %v128, 2
    %v130 = vadd.f32 %v128, %v129
    %v131 = vrot.slane %v130, 1
    %v132 = vadd.f32 %v130, %v131
    %v133 = vrot.slane %v56, 4
    %v134 = vadd.f32 %v56, %v133
    %v135 = vrot.slane %v134, 2
    %v136 = vadd.f32 %v134, %v135
    %v137 = vrot.slane %v136, 1
    %v138 = vadd.f32 %v136, %v137
    %v139 = vrot.slane %v57, 4
    %v140 = vadd.f32 %v57, %v139
    %v141 = vrot.slane %v140, 2
    %v142 = vadd.f32 %v140, %v141
    %v143 = vrot.slane %v142, 1
    %v144 = vadd.f32 %v142, %v143
    %v145 = vrot.slane %v58, 4
    %v146 = vadd.f32 %v58, %v145
    %v147 = vrot.slane %v146, 2
    %v148 = vadd.f32 %v146, %v147
    %v149 = vrot.slane %v148, 1
    %v150 = vadd.f32 %v148, %v149
    %v151 = vrot.slane %v59, 4
    %v152 = vadd.f32 %v59, %v151
    %v153 = vrot.slane %v152, 2
    %v154 = vadd.f32 %v152, %v153
    %v155 = vrot.slane %v154, 1
    %v156 = vadd.f32 %v154, %v155
    %v157 = vrot.slane %v60, 4
    %v158 = vadd.f32 %v60, %v157
    %v159 = vrot.slane %v158, 2
    %v160 = vadd.f32 %v158, %v159
    %v161 = vrot.slane %v160, 1
    %v162 = vadd.f32 %v160, %v161
    %v163 = vrot.slane %v61, 4
    %v164 = vadd.f32 %v61, %v163
    %v165 = vrot.slane %v164, 2
    %v166 = vadd.f32 %v164, %v165
    %v167 = vrot.slane %v166, 1
    %v168 = vadd.f32 %v166, %v167
    %v169 = vrot.slane %v62, 4
    %v170 = vadd.f32 %v62, %v169
    %v171 = vrot.slane %v170, 2
    %v172 = vadd.f32 %v170, %v171
    %v173 = vrot.slane %v172, 1
    %v174 = vadd.f32 %v172, %v173
    %v175 = vrot.slane %v63, 4
    %v176 = vadd.f32 %v63, %v175
    %v177 = vrot.slane %v176, 2
    %v178 = vadd.f32 %v176, %v177
    %v179 = vrot.slane %v178, 1
    %v180 = vadd.f32 %v178, %v179
    %v181 = vrot.slane %v64, 4
    %v182 = vadd.f32 %v64, %v181
    %v183 = vrot.slane %v182, 2
    %v184 = vadd.f32 %v182, %v183
    %v185 = vrot.slane %v184, 1
    %v186 = vadd.f32 %v184, %v185
    %v187 = vrot.slane %v65, 4
    %v188 = vadd.f32 %v65, %v187
    %v189 = vrot.slane %v188, 2
    %v190 = vadd.f32 %v188, %v189
    %v191 = vrot.slane %v190, 1
    %v192 = vadd.f32 %v190, %v191
    %v193 = vrot.slane %v66, 4
    %v194 = vadd.f32 %v66, %v193
    %v195 = vrot.slane %v194, 2
    %v196 = vadd.f32 %v194, %v195
    %v197 = vrot.slane %v196, 1
    %v198 = vadd.f32 %v196, %v197
    %v199 = vrot.slane %v67, 4
    %v200 = vadd.f32 %v67, %v199
    %v201 = vrot.slane %v200, 2
    %v202 = vadd.f32 %v200, %v201
    %v203 = vrot.slane %v202, 1
    %v204 = vadd.f32 %v202, %v203
    %v205 = vrot.slane %v68, 4
    %v206 = vadd.f32 %v68, %v205
    %v207 = vrot.slane %v206, 2
    %v208 = vadd.f32 %v206, %v207
    %v209 = vrot.slane %v208, 1
    %v210 = vadd.f32 %v208, %v209
    %v211 = vrot.slane %v69, 4
    %v212 = vadd.f32 %v69, %v211
    %v213 = vrot.slane %v212, 2
    %v214 = vadd.f32 %v212, %v213
    %v215 = vrot.slane %v214, 1
    %v216 = vadd.f32 %v214, %v215
    %v217 = vrot.slane %v70, 4
    %v218 = vadd.f32 %v70, %v217
    %v219 = vrot.slane %v218, 2
    %v220 = vadd.f32 %v218, %v219
    %v221 = vrot.slane %v220, 1
    %v222 = vadd.f32 %v220, %v221
    %v223 = vrot.slane %v71, 4
    %v224 = vadd.f32 %v71, %v223
    %v225 = vrot.slane %v224, 2
    %v226 = vadd.f32 %v224, %v225
    %v227 = vrot.slane %v226, 1
    %v228 = vadd.f32 %v226, %v227
    %v229 = vrot.slane %v72, 4
    %v230 = vadd.f32 %v72, %v229
    %v231 = vrot.slane %v230, 2
    %v232 = vadd.f32 %v230, %v231
    %v233 = vrot.slane %v232, 1
    %v234 = vadd.f32 %v232, %v233
    %v235 = vrot.slane %v73, 4
    %v236 = vadd.f32 %v73, %v235
    %v237 = vrot.slane %v236, 2
    %v238 = vadd.f32 %v236, %v237
    %v239 = vrot.slane %v238, 1
    %v240 = vadd.f32 %v238, %v239
    %v241 = vrot.slane %v74, 4
    %v242 = vadd.f32 %v74, %v241
    %v243 = vrot.slane %v242, 2
    %v244 = vadd.f32 %v242, %v243
    %v245 = vrot.slane %v244, 1
    %v246 = vadd.f32 %v244, %v245
    %v247 = vrot.slane %v75, 4
    %v248 = vadd.f32 %v75, %v247
    %v249 = vrot.slane %v248, 2
    %v250 = vadd.f32 %v248, %v249
    %v251 = vrot.slane %v250, 1
    %v252 = vadd.f32 %v250, %v251
    %v253 = vrot.slane %v76, 4
    %v254 = vadd.f32 %v76, %v253
    %v255 = vrot.slane %v254, 2
    %v256 = vadd.f32 %v254, %v255
    %v257 = vrot.slane %v256, 1
    %v258 = vadd.f32 %v256, %v257
    %v259 = vrot.slane %v77, 4
    %v260 = vadd.f32 %v77, %v259
    %v261 = vrot.slane %v260, 2
    %v262 = vadd.f32 %v260, %v261
    %v263 = vrot.slane %v262, 1
    %v264 = vadd.f32 %v262, %v263
    %v265 = vrot.slane %v78, 4
    %v266 = vadd.f32 %v78, %v265
    %v267 = vrot.slane %v266, 2
    %v268 = vadd.f32 %v266, %v267
    %v269 = vrot.slane %v268, 1
    %v270 = vadd.f32 %v268, %v269
    %v271 = vld [vmem:[#allocation5] sm:$0xff]
    %v272 = vld [vmem:[#allocation5 + $0x8] sm:$0xff]
    %v273 = vld [vmem:[#allocation5 + $0x10] sm:$0xff]
    %v274 = vld [vmem:[#allocation5 + $0x18] sm:$0xff]
    %v275 = vld [vmem:[#allocation5 + $0x20] sm:$0xff]
    %v276 = vld [vmem:[#allocation5 + $0x28] sm:$0xff]
    %v277 = vld [vmem:[#allocation5 + $0x30] sm:$0xff]
    %v278 = vld [vmem:[#allocation5 + $0x38] sm:$0xff]
    %v279 = vld [vmem:[#allocation5 + $0x40] sm:$0xff]
    %v280 = vld [vmem:[#allocation5 + $0x48] sm:$0xff]
    %v281 = vld [vmem:[#allocation5 + $0x50] sm:$0xff]
    %v282 = vld [vmem:[#allocation5 + $0x58] sm:$0xff]
    %v283 = vld [vmem:[#allocation5 + $0x60] sm:$0xff]
    %v284 = vld [vmem:[#allocation5 + $0x68] sm:$0xff]
    %v285 = vld [vmem:[#allocation5 + $0x70] sm:$0xff]
    %v286 = vld [vmem:[#allocation5 + $0x78] sm:$0xff]
    %v287 = vld [vmem:[#allocation5 + $0x80] sm:$0xff]
    %v288 = vld [vmem:[#allocation5 + $0x88] sm:$0xff]
    %v289 = vld [vmem:[#allocation5 + $0x90] sm:$0xff]
    %v290 = vld [vmem:[#allocation5 + $0x98] sm:$0xff]
    %v291 = vld [vmem:[#allocation5 + $0xa0] sm:$0xff]
    %v292 = vld [vmem:[#allocation5 + $0xa8] sm:$0xff]
    %v293 = vld [vmem:[#allocation5 + $0xb0] sm:$0xff]
    %v294 = vld [vmem:[#allocation5 + $0xb8] sm:$0xff]
    %v295 = vld [vmem:[#allocation5 + $0xc0] sm:$0xff]
    %v296 = vld [vmem:[#allocation5 + $0xc8] sm:$0xff]
    %v297 = vld [vmem:[#allocation5 + $0xd0] sm:$0xff]
    %v298 = vld [vmem:[#allocation5 + $0xd8] sm:$0xff]
    %v299 = vld [vmem:[#allocation5 + $0xe0] sm:$0xff]
    %v300 = vld [vmem:[#allocation5 + $0xe8] sm:$0xff]
    %v301 = vld [vmem:[#allocation5 + $0xf0] sm:$0xff]
    %v302 = vld [vmem:[#allocation5 + $0xf8] sm:$0xff]
    %v303 = vld [vmem:[#allocation5 + $0x100] sm:$0xff]
    %v304 = vld [vmem:[#allocation5 + $0x108] sm:$0xff]
    %v305 = vld [vmem:[#allocation5 + $0x110] sm:$0xff]
    %v306 = vld [vmem:[#allocation5 + $0x118] sm:$0xff]
    %v307 = vld [vmem:[#allocation5 + $0x120] sm:$0xff]
    %v308 = vld [vmem:[#allocation5 + $0x128] sm:$0xff]
    %v309 = vld [vmem:[#allocation5 + $0x130] sm:$0xff]
    %v310 = vld [vmem:[#allocation5 + $0x138] sm:$0xff]
    %v311 = vld [vmem:[#allocation5 + $0x140] sm:$0xff]
    %v312 = vld [vmem:[#allocation5 + $0x148] sm:$0xff]
    %v313 = vld [vmem:[#allocation5 + $0x150] sm:$0xff]
    %v314 = vld [vmem:[#allocation5 + $0x158] sm:$0xff]
    %v315 = vld [vmem:[#allocation5 + $0x160] sm:$0xff]
    %v316 = vld [vmem:[#allocation5 + $0x168] sm:$0xff]
    %v317 = vld [vmem:[#allocation5 + $0x170] sm:$0xff]
    %v318 = vld [vmem:[#allocation5 + $0x178] sm:$0xff]
    %v319 = vld [vmem:[#allocation5 + $0x180] sm:$0xff]
    %v320 = vld [vmem:[#allocation5 + $0x188] sm:$0xff]
    %v321 = vld [vmem:[#allocation5 + $0x190] sm:$0xff]
    %v322 = vld [vmem:[#allocation5 + $0x198] sm:$0xff]
    %v323 = vld [vmem:[#allocation5 + $0x1a0] sm:$0xff]
    %v324 = vld [vmem:[#allocation5 + $0x1a8] sm:$0xff]
    %v325 = vld [vmem:[#allocation5 + $0x1b0] sm:$0xff]
    %v326 = vld [vmem:[#allocation5 + $0x1b8] sm:$0xff]
    %v327 = vld [vmem:[#allocation5 + $0x1c0] sm:$0xff]
    %v328 = vld [vmem:[#allocation5 + $0x1c8] sm:$0xff]
    %v329 = vld [vmem:[#allocation5 + $0x1d0] sm:$0xff]
    %v330 = vld [vmem:[#allocation5 + $0x1d8] sm:$0xff]
    %v331 = vld [vmem:[#allocation5 + $0x1e0] sm:$0xff]
    %v332 = vld [vmem:[#allocation5 + $0x1e8] sm:$0xff]
    %v333 = vld [vmem:[#allocation5 + $0x1f0] sm:$0xff]
    %v334 = vld [vmem:[#allocation5 + $0x1f8] sm:$0xff]
    %v335 = vld [vmem:[%s2] sm:$0x1]
    %v337 = vperm.slane %v335, 0
    %vm371 = vcmask 1041409
    %v372 = vsel %vm371, %v108, %v84
    %vm373 = vcmask 1042434
    %v374 = vsel %vm373, %v132, %v372
    %vm375 = vcmask 1043459
    %v376 = vsel %vm375, %v156, %v374
    %vm377 = vcmask 1044484
    %v378 = vsel %vm377, %v180, %v376
    %vm379 = vcmask 1045509
    %v380 = vsel %vm379, %v204, %v378
    %vm381 = vcmask 1046534
    %v382 = vsel %vm381, %v228, %v380
    %vm383 = vcmask 1047559
    %v384 = vsel %vm383, %v252, %v382
    %v385 = vsel %vm371, %v114, %v90
    %v386 = vsel %vm373, %v138, %v385
    %v387 = vsel %vm375, %v162, %v386
    %v388 = vsel %vm377, %v186, %v387
    %v389 = vsel %vm379, %v210, %v388
    %v390 = vsel %vm381, %v234, %v389
    %v391 = vsel %vm383, %v258, %v390
    %v392 = vsel %vm371, %v120, %v96
    %v393 = vsel %vm373, %v144, %v392
    %v394 = vsel %vm375, %v168, %v393
    %v395 = vsel %vm377, %v192, %v394
    %v396 = vsel %vm379, %v216, %v395
    %v397 = vsel %vm381, %v240, %v396
    %v398 = vsel %vm383, %v264, %v397
    %v399 = vsel %vm371, %v126, %v102
    %v400 = vsel %vm373, %v150, %v399
    %v401 = vsel %vm375, %v174, %v400
    %v402 = vsel %vm377, %v198, %v401
    %v403 = vsel %vm379, %v222, %v402
    %v404 = vsel %vm381, %v246, %v403
    %v405 = vsel %vm383, %v270, %v404
    %410 = vmatpush.msra.mxu0 %v286
    %411 = vmatpush.msra.mxu0 %v285
    %412 = vmatpush.msra.mxu0 %v284
    %413 = vmatpush.msra.mxu0 %v283
    %414 = vmatpush.msra.mxu0 %v282
    %415 = vmatpush.msra.mxu0 %v281
    %416 = vmatpush.msra.mxu0 %v280
    %417 = vmatpush.msra.mxu0 %v279
    %418 = vmatpush.msra.mxu0 %v278
    %419 = vmatpush.msra.mxu0 %v277
    %420 = vmatpush.msra.mxu0 %v276
    %421 = vmatpush.msra.mxu0 %v275
    %422 = vmatpush.msra.mxu0 %v274
    %423 = vmatpush.msra.mxu0 %v273
    %424 = vmatpush.msra.mxu0 %v272
    %425 = vmatpush.msra.mxu0 %v271
    %426 = vmatmul.f32.gmra.mxu0 %v384
    %v427 = vpop.f32.mrf.mxu0
    %v428 = vadd.f32 %v337, %v427
    %429 = vdwg.mxu0
    %430 = vmatpush.msra.mxu0 %v302
    %431 = vmatpush.msra.mxu0 %v301
    %432 = vmatpush.msra.mxu0 %v300
    %433 = vmatpush.msra.mxu0 %v299
    %434 = vmatpush.msra.mxu0 %v298
    %435 = vmatpush.msra.mxu0 %v297
    %436 = vmatpush.msra.mxu0 %v296
    %437 = vmatpush.msra.mxu0 %v295
    %438 = vmatpush.msra.mxu0 %v294
    %439 = vmatpush.msra.mxu0 %v293
    %440 = vmatpush.msra.mxu0 %v292
    %441 = vmatpush.msra.mxu0 %v291
    %442 = vmatpush.msra.mxu0 %v290
    %443 = vmatpush.msra.mxu0 %v289
    %444 = vmatpush.msra.mxu0 %v288
    %445 = vmatpush.msra.mxu0 %v287
    %446 = vmatmul.f32.gmra.mxu0 %v391
    %v447 = vpop.f32.mrf.mxu0
    %v448 = vadd.f32 %v428, %v447
    %449 = vdwg.mxu0
    %450 = vmatpush.msra.mxu0 %v318
    %451 = vmatpush.msra.mxu0 %v317
    %452 = vmatpush.msra.mxu0 %v316
    %453 = vmatpush.msra.mxu0 %v315
    %454 = vmatpush.msra.mxu0 %v314
    %455 = vmatpush.msra.mxu0 %v313
    %456 = vmatpush.msra.mxu0 %v312
    %457 = vmatpush.msra.mxu0 %v311
    %458 = vmatpush.msra.mxu0 %v310
    %459 = vmatpush.msra.mxu0 %v309
    %460 = vmatpush.msra.mxu0 %v308
    %461 = vmatpush.msra.mxu0 %v307
    %462 = vmatpush.msra.mxu0 %v306
    %463 = vmatpush.msra.mxu0 %v305
    %464 = vmatpush.msra.mxu0 %v304
    %465 = vmatpush.msra.mxu0 %v303
    %466 = vmatmul.f32.gmra.mxu0 %v398
    %v467 = vpop.f32.mrf.mxu0
    %v468 = vadd.f32 %v448, %v467
    %469 = vdwg.mxu0
    %470 = vmatpush.msra.mxu0 %v334
    %471 = vmatpush.msra.mxu0 %v333
    %472 = vmatpush.msra.mxu0 %v332
    %473 = vmatpush.msra.mxu0 %v331
    %474 = vmatpush.msra.mxu0 %v330
    %475 = vmatpush.msra.mxu0 %v329
    %476 = vmatpush.msra.mxu0 %v328
    %477 = vmatpush.msra.mxu0 %v327
    %478 = vmatpush.msra.mxu0 %v326
    %479 = vmatpush.msra.mxu0 %v325
    %480 = vmatpush.msra.mxu0 %v324
    %481 = vmatpush.msra.mxu0 %v323
    %482 = vmatpush.msra.mxu0 %v322
    %483 = vmatpush.msra.mxu0 %v321
    %484 = vmatpush.msra.mxu0 %v320
    %485 = vmatpush.msra.mxu0 %v319
    %486 = vmatmul.f32.gmra.mxu0 %v405
    %v487 = vpop.f32.mrf.mxu0
    %v488 = vadd.f32 %v468, %v487
    %489 = vdwg.mxu0
    %490 = vst [vmem:[#allocation7] sm:$0xff] %v488
    // Predicated region
    $region22: #{tpu_custom_call.1} parent=1 // pred_check
      _
    $region23: #{tpu_custom_call.1} parent=1 // pred_check_branch
      %492 = sbr.rel (0) target = $region25
    $region24: #{tpu_custom_call.1} parent=1 // pred_region
      %494 = vsyncadd [#allocation4], 0
      %s496 = sshll.u32 [#allocation7], 4
      %s497 = int_to_ptr.vmem [resolvable:$true] %s496
      %s498 = sshll.u32 %s3, 4
      %s499 = int_to_ptr.hbm [resolvable:$true] %s498
      %501 = dma.vmem_to_hbm [thread:$0]  %s497, 128, %s499, [#allocation4]
    $region25: #{tpu_custom_call.1} parent=1 // pred_fallthru
      _
    // Predicated region
    $region26: #{tpu_custom_call.1} parent=1 // pred_check
      _
    $region27: #{tpu_custom_call.1} parent=1 // pred_check_branch
      %503 = sbr.rel (0) target = $region29
    $region28: #{tpu_custom_call.1} parent=1 // pred_region
      %505 = dma.done [#allocation4], 128
    $region29: #{tpu_custom_call.1} parent=1 // pred_fallthru
      _
    %506 = vsyncpa [#allocation3], 1
    %507 = vsyncpa [#allocation6], 1
    %508 = vsyncpa [#allocation4], 1

</llo_original>
